<compile_context>
chip_gen: v5e
topology: v5e:2x2
jax: 0.10.0
libtpu: 0.0.40
codegen_flags: <defaults>
</compile_context>

<pallas_src>
import jax
import jax.numpy as jnp
from jax.experimental import pallas as pl
from jax.experimental.pallas import tpu as pltpu


def _round_up(v: int, mult: int) -> int:
    return ((v + mult - 1) // mult) * mult


# ---------------------------------------------------------------------------
# Kernel: one (tm, tn) output tile; grid axis 2 walks the K reduction.
# ---------------------------------------------------------------------------
def _matmul_kernel(x_ref, w_ref, o_ref, acc_ref):
    @pl.when(pl.program_id(2) == 0)
    def _init():
        acc_ref[...] = jnp.zeros_like(acc_ref)

    acc_ref[...] += jnp.dot(
        x_ref[...], w_ref[...], preferred_element_type=jnp.float32
    )

    @pl.when(pl.program_id(2) == pl.num_programs(2) - 1)
    def _finalize():
        o_ref[...] = acc_ref[...].astype(o_ref.dtype)


def _tiled_matmul(x2d, w, *, tm, tn, tk):
    M, K = x2d.shape
    _, N = w.shape
    grid = (M // tm, N // tn, K // tk)
    return pl.pallas_call(
        _matmul_kernel,
        out_shape=jax.ShapeDtypeStruct((M, N), w.dtype),
        grid_spec=pltpu.PrefetchScalarGridSpec(
            num_scalar_prefetch=0,
            grid=grid,
            in_specs=[
                pl.BlockSpec((tm, tk), lambda i, j, k: (i, k)),
                pl.BlockSpec((tk, tn), lambda i, j, k: (k, j)),
            ],
            out_specs=pl.BlockSpec((tm, tn), lambda i, j, k: (i, j)),
            scratch_shapes=[pltpu.VMEM((tm, tn), jnp.float32)],
        ),
        compiler_params=pltpu.CompilerParams(
            dimension_semantics=("parallel", "parallel", "arbitrary")
        ),
    )(x2d, w)


# ---------------------------------------------------------------------------
# Module-level forward: LowRankRotateLayer.forward(x) = x.to(w.dtype) @ w
# ---------------------------------------------------------------------------
@jax.jit
def low_rank_rotate_forward(x, weight):
    """x: (..., n) with any leading dims; weight: (n, m) -> (..., m)."""
    n, m = weight.shape
    lead = x.shape[:-1]
    x2d = x.reshape(-1, n).astype(weight.dtype)   # matches x.to(weight.dtype)
    M = x2d.shape[0]

    # Tile sizes: (8,128)-aligned, lane-dense output, VMEM-safe everywhere.
    tm = min(256, _round_up(M, 8))
    tn = min(256, _round_up(m, 128))
    tk = min(512, _round_up(n, 128))

    Mp, Kp, Np = _round_up(M, tm), _round_up(n, tk), _round_up(m, tn)

    xp = x2d if (Mp == M and Kp == n) else jnp.pad(
        x2d, ((0, Mp - M), (0, Kp - n)))
    wp = weight if (Kp == n and Np == m) else jnp.pad(
        weight, ((0, Kp - n), (0, Np - m)))

    out = _tiled_matmul(xp, wp, tm=tm, tn=tn, tk=tk)
    return out[:M, :m].reshape(*lead, m)


if __name__ == "__main__":
    key = jax.random.PRNGKey(0)
    kx, kw, kx2, kw2 = jax.random.split(key, 4)

    # Small shapes consistent with the module: batch=2, seq=8, n=32, rank m=4.
    B, S, n, m = 2, 8, 32, 4
    x = jax.random.normal(kx, (B, S, n), dtype=jnp.float32)

    # Orthogonal init (orthonormal columns), mirroring torch.nn.init.orthogonal_
    # (init-time only, not part of the Pallas forward).
    w_raw = jax.random.normal(kw, (n, m), dtype=jnp.float32)
    weight, _ = jnp.linalg.qr(w_raw)

    out = low_rank_rotate_forward(x, weight)
    out = jax.block_until_ready(out)
    ref = x.astype(weight.dtype) @ weight
    assert out.shape == (B, S, m), out.shape
    assert jnp.allclose(out, ref, atol=1e-4, rtol=1e-4), "small-shape mismatch"

    # Second check: exercise multi-block M / K-accumulation grid path.
    x2 = jax.random.normal(kx2, (4, 128, 1024), dtype=jnp.float32)
    w2 = jax.random.normal(kw2, (1024, 256), dtype=jnp.float32) * 0.03
    out2 = jax.block_until_ready(low_rank_rotate_forward(x2, w2))
    ref2 = jnp.dot(
        x2.reshape(-1, 1024), w2, precision=jax.lax.Precision.HIGHEST
    ).reshape(4, 128, 256)
    assert out2.shape == (4, 128, 256), out2.shape
    assert jnp.allclose(out2, ref2, atol=1e-2, rtol=1e-2), "tiled-path mismatch"

    print("KERNEL_OK")
</pallas_src>

<mosaic_0001>
module attributes {stable_mosaic.version = 11 : i64} {
  func.func @_matmul_kernel(%arg0: i32, %arg1: i32, %arg2: i32, %arg3: memref<16x128xf32, #tpu.memory_space<vmem>>, %arg4: memref<128x128xf32, #tpu.memory_space<vmem>>, %arg5: memref<16x128xf32, #tpu.memory_space<vmem>>, %arg6: memref<16x128xf32, #tpu.memory_space<vmem>>) attributes {dimension_semantics = [#tpu.dimension_semantics<parallel>, #tpu.dimension_semantics<parallel>, #tpu.dimension_semantics<arbitrary>], iteration_bounds = array<i64: 1, 1, 1>, scalar_prefetch = 0 : i64, scratch_operands = 1 : i64, tpu.core_type = #tpu.core_type<tc>, window_params = [{transform_indices = @transform_0, window_bounds = array<i64: 16, 128>}, {transform_indices = @transform_1, window_bounds = array<i64: 128, 128>}, {transform_indices = @transform_2, window_bounds = array<i64: 16, 128>}]} {
    %c0_i32 = arith.constant 0 : i32
    %0 = arith.cmpi eq, %arg2, %c0_i32 : i32
    %1 = arith.extui %0 : i1 to i32
    %c0_i32_0 = arith.constant 0 : i32
    %2 = arith.cmpi ne, %1, %c0_i32_0 : i32
    scf.if %2 {
      %cst_10 = arith.constant 0.000000e+00 : f32
      %12 = vector.broadcast %cst_10 : f32 to vector<16x128xf32>
      %c0_11 = arith.constant 0 : index
      %c0_12 = arith.constant 0 : index
      %13 = vector.load %arg6[%c0_11, %c0_12] : memref<16x128xf32, #tpu.memory_space<vmem>>, vector<16x128xf32>
      tpu.vector_store %arg6[%c0_11, %c0_12], %12 {strides = array<i32>} : memref<16x128xf32, #tpu.memory_space<vmem>>, vector<16x128xf32>,
    } else {
    }
    %c0 = arith.constant 0 : index
    %c0_1 = arith.constant 0 : index
    %3 = vector.load %arg6[%c0, %c0_1] : memref<16x128xf32, #tpu.memory_space<vmem>>, vector<16x128xf32>
    %c0_2 = arith.constant 0 : index
    %c0_3 = arith.constant 0 : index
    %4 = vector.load %arg3[%c0_2, %c0_3] : memref<16x128xf32, #tpu.memory_space<vmem>>, vector<16x128xf32>
    %c0_4 = arith.constant 0 : index
    %c0_5 = arith.constant 0 : index
    %5 = vector.load %arg4[%c0_4, %c0_5] : memref<128x128xf32, #tpu.memory_space<vmem>>, vector<128x128xf32>
    %cst = arith.constant dense<0.000000e+00> : vector<16x128xf32>
    %6 = tpu.matmul %4, %5, %cst {dimension_numbers = #tpu.dot_dimension_numbers<[1], [0], [0], [1], [0, 0, 1, 1], [], []>} : vector<16x128xf32>, vector<128x128xf32>, vector<16x128xf32> -> vector<16x128xf32>
    %7 = arith.addf %3, %6 : vector<16x128xf32>
    %c0_6 = arith.constant 0 : index
    %c0_7 = arith.constant 0 : index
    %8 = vector.load %arg6[%c0_6, %c0_7] : memref<16x128xf32, #tpu.memory_space<vmem>>, vector<16x128xf32>
    tpu.vector_store %arg6[%c0_6, %c0_7], %7 {strides = array<i32>} : memref<16x128xf32, #tpu.memory_space<vmem>>, vector<16x128xf32>,
    %c0_i32_8 = arith.constant 0 : i32
    %9 = arith.cmpi eq, %arg2, %c0_i32_8 : i32
    %10 = arith.extui %9 : i1 to i32
    %c0_i32_9 = arith.constant 0 : i32
    %11 = arith.cmpi ne, %10, %c0_i32_9 : i32
    scf.if %11 {
      %c0_10 = arith.constant 0 : index
      %c0_11 = arith.constant 0 : index
      %12 = vector.load %arg6[%c0_10, %c0_11] : memref<16x128xf32, #tpu.memory_space<vmem>>, vector<16x128xf32>
      %c0_12 = arith.constant 0 : index
      %c0_13 = arith.constant 0 : index
      %13 = vector.load %arg5[%c0_12, %c0_13] : memref<16x128xf32, #tpu.memory_space<vmem>>, vector<16x128xf32>
      tpu.vector_store %arg5[%c0_12, %c0_13], %12 {strides = array<i32>} : memref<16x128xf32, #tpu.memory_space<vmem>>, vector<16x128xf32>,
    } else {
    }
    return
  }
  func.func @transform_0(%arg0: i32, %arg1: i32, %arg2: i32) -> (i32, i32) {
    %c0_i32 = arith.constant 0 : i32
    return %arg0, %arg2 : i32, i32
  }
  func.func @transform_1(%arg0: i32, %arg1: i32, %arg2: i32) -> (i32, i32) {
    %c0_i32 = arith.constant 0 : i32
    return %arg2, %arg1 : i32, i32
  }
  func.func @transform_2(%arg0: i32, %arg1: i32, %arg2: i32) -> (i32, i32) {
    %c0_i32 = arith.constant 0 : i32
    return %arg0, %arg1 : i32, i32
  }
}

</mosaic_0001>

<llo_original>
// kernel: low_rank_rotate_forward.1
$region0: #{low_rank_rotate_forward.1}
  #allocation0 [shape = 'u32[]', space=smem, size = 0x4, offset = 0x4, fixed_abs, tag = 'smem constant byte address 0x4 - core index']
  #allocation1 [shape = 'u32[72,128]{1,0:T(1,128)}', space=vmem, size = 0x9000, scoped, tag = 'internal scratch']
  #allocation2 [shape = 'f32[16,128]{1,0:T(8,128)}', space=vmem, size = 0x2000, scoped, tag = 'scratch operand']
  %s0 = inlined_call_operand.vmem [shape: f32[16,128], index: 0, kind: input, shape index: {}]
  %s1 = inlined_call_operand.vmem [shape: f32[128,128], index: 1, kind: input, shape index: {}]
  %s2 = inlined_call_operand.vmem [shape: f32[16,128], index: 2, kind: output, shape index: {}]
  %s3 = sld [smem:[#allocation0]]
  $region26: #{low_rank_rotate_forward.1} parent=0
    _
  %s5 = ssub.s32 1, %s3
  %s6 = scalar_select 0, %s5, %s3
  // Predicated region
  $region2: #{low_rank_rotate_forward.1} parent=0 // pred_check
    _
  $region3: #{low_rank_rotate_forward.1} parent=0 // pred_check_branch
    %8 = sbr.rel (0) target = $region5
  $region4: #{low_rank_rotate_forward.1} parent=0 // pred_region
    _
  $region5: #{low_rank_rotate_forward.1} parent=0 // pred_fallthru
    _
  // Predicated region
  $region6: #{low_rank_rotate_forward.1} parent=0 // pred_check
    _
  $region7: #{low_rank_rotate_forward.1} parent=0 // pred_check_branch
    %10 = sbr.rel (0) target = $region9
  $region8: #{low_rank_rotate_forward.1} parent=0 // pred_region
    _
  $region9: #{low_rank_rotate_forward.1} parent=0 // pred_fallthru
    _
  %p11 = scmp.eq.s32.totalorder 0, 0
  // Predicated region
  $region10: #{low_rank_rotate_forward.1} parent=0 // pred_check
    %p12 = pneg %p11
  $region11: #{low_rank_rotate_forward.1} parent=0 // pred_check_branch
    %14 = sbr.rel (%p12) target = $region13
  $region12: #{low_rank_rotate_forward.1} parent=0 // pred_region
    %15 = vst [vmem:[#allocation2] sm:$0xff] 0.0
    %16 = vst [vmem:[#allocation2 + $0x8] sm:$0xff] 0.0
  $region13: #{low_rank_rotate_forward.1} parent=0 // pred_fallthru
    _
  %v17 = vld [vmem:[#allocation2] sm:$0xff]
  %v18 = vld [vmem:[#allocation2 + $0x8] sm:$0xff]
  %v19 = vld [vmem:[%s0] sm:$0xff]
  %v20 = vld [vmem:[%s0 + $0x8] sm:$0xff]
  %v21 = vld [vmem:[%s1] sm:$0xff]
  %v22 = vld [vmem:[%s1 + $0x8] sm:$0xff]
  %v23 = vld [vmem:[%s1 + $0x10] sm:$0xff]
  %v24 = vld [vmem:[%s1 + $0x18] sm:$0xff]
  %v25 = vld [vmem:[%s1 + $0x20] sm:$0xff]
  %v26 = vld [vmem:[%s1 + $0x28] sm:$0xff]
  %v27 = vld [vmem:[%s1 + $0x30] sm:$0xff]
  %v28 = vld [vmem:[%s1 + $0x38] sm:$0xff]
  %v29 = vld [vmem:[%s1 + $0x40] sm:$0xff]
  %v30 = vld [vmem:[%s1 + $0x48] sm:$0xff]
  %v31 = vld [vmem:[%s1 + $0x50] sm:$0xff]
  %v32 = vld [vmem:[%s1 + $0x58] sm:$0xff]
  %v33 = vld [vmem:[%s1 + $0x60] sm:$0xff]
  %v34 = vld [vmem:[%s1 + $0x68] sm:$0xff]
  %v35 = vld [vmem:[%s1 + $0x70] sm:$0xff]
  %v36 = vld [vmem:[%s1 + $0x78] sm:$0xff]
  %37 = vmatpush.msra.mxu0 %v36
  %38 = vmatpush.msra.mxu0 %v35
  %39 = vmatpush.msra.mxu0 %v34
  %40 = vmatpush.msra.mxu0 %v33
  %41 = vmatpush.msra.mxu0 %v32
  %42 = vmatpush.msra.mxu0 %v31
  %43 = vmatpush.msra.mxu0 %v30
  %44 = vmatpush.msra.mxu0 %v29
  %45 = vmatpush.msra.mxu0 %v28
  %46 = vmatpush.msra.mxu0 %v27
  %47 = vmatpush.msra.mxu0 %v26
  %48 = vmatpush.msra.mxu0 %v25
  %49 = vmatpush.msra.mxu0 %v24
  %50 = vmatpush.msra.mxu0 %v23
  %51 = vmatpush.msra.mxu0 %v22
  %52 = vmatpush.msra.mxu0 %v21
  %53 = vmatmul.f32.gmra.mxu0 %v19
  %v54 = vpop.f32.mrf.mxu0
  %v55 = vadd.f32 0.0, %v54
  %56 = vmatmul.f32.gmra.mxu0 %v20
  %v57 = vpop.f32.mrf.mxu0
  %v58 = vadd.f32 0.0, %v57
  %59 = vdwg.mxu0
  %v60 = vadd.f32 %v17, %v55
  %v61 = vadd.f32 %v18, %v58
  %62 = vst [vmem:[#allocation2] sm:$0xff] %v60
  %63 = vst [vmem:[#allocation2 + $0x8] sm:$0xff] %v61
  // Predicated region
  $region14: #{low_rank_rotate_forward.1} parent=0 // pred_check
    %p64 = pneg %p11
  $region15: #{low_rank_rotate_forward.1} parent=0 // pred_check_branch
    %66 = sbr.rel (%p64) target = $region17
  $region16: #{low_rank_rotate_forward.1} parent=0 // pred_region
    %v67 = vld [vmem:[#allocation2] sm:$0xff]
    %v68 = vld [vmem:[#allocation2 + $0x8] sm:$0xff]
    %69 = vst [vmem:[%s2] sm:$0xff] %v67
    %70 = vst [vmem:[%s2 + $0x8] sm:$0xff] %v68
  $region17: #{low_rank_rotate_forward.1} parent=0 // pred_fallthru
    _
  // Predicated region
  $region18: #{low_rank_rotate_forward.1} parent=0 // pred_check
    _
  $region19: #{low_rank_rotate_forward.1} parent=0 // pred_check_branch
    %72 = sbr.rel (0) target = $region21
  $region20: #{low_rank_rotate_forward.1} parent=0 // pred_region
    _
  $region21: #{low_rank_rotate_forward.1} parent=0 // pred_fallthru
    _
  // Predicated region
  $region22: #{low_rank_rotate_forward.1} parent=0 // pred_check
    _
  $region23: #{low_rank_rotate_forward.1} parent=0 // pred_check_branch
    %74 = sbr.rel (0) target = $region25
  $region24: #{low_rank_rotate_forward.1} parent=0 // pred_region
    _
  $region25: #{low_rank_rotate_forward.1} parent=0 // pred_fallthru
    _

</llo_original>
